<compile_context>
chip_gen: v7x
topology: tpu7x:2x2x1
jax: 0.10.0
libtpu: 0.0.40
codegen_flags: <defaults>
</compile_context>

<pallas_src>
import functools

import jax
import jax.numpy as jnp
from jax.experimental import pallas as pl
from jax.experimental.pallas import tpu as pltpu

LANE = 128      # TPU lane width; padded feature dims are multiples of this
SUBLANE = 8     # sublane alignment for row offsets / batch tile
MAX_TM = 512    # cap on batch rows per grid step (overhead amortization, not VMEM)


def _round_up(n, m):
    return (n + m - 1) // m * m


def actor_mlp_kernel(x_ref, w_ref, b_ref, o_ref, *, S, H1p, H2p, Ap, Wcat, r2, r3):
    """Fused fc1+ReLU -> fc2+ReLU -> fc3+tanh.

    w_ref: (S8 + H1p + H2p, Wcat) bf16 row-concatenated [w1; w2; w3], zero-padded.
    b_ref: (1, 3*Wcat) f32 lane-concatenated [b1 | b2 | b3], zero-padded.
    """
    x = x_ref[...].astype(jnp.bfloat16)

    # Static slices of the resident weight / bias buffers (no extra DMAs).
    w1 = w_ref[0:S, :]            # (S,   Wcat)  cols >= H1p are zero
    w2 = w_ref[r2:r2 + H1p, :]    # (H1p, Wcat)  cols >= H2p are zero
    w3 = w_ref[r3:r3 + H2p, :]    # (H2p, Wcat)  cols >= Ap  are zero
    b1 = b_ref[:, 0:Wcat]
    b2 = b_ref[:, Wcat:2 * Wcat]
    b3 = b_ref[:, 2 * Wcat:3 * Wcat]

    # fc1 + ReLU (bf16 MXU inputs, f32 accumulate / elementwise)
    h1 = jnp.dot(x, w1, preferred_element_type=jnp.float32) + b1
    h1 = jnp.maximum(h1, 0.0).astype(jnp.bfloat16)
    # fc2 + ReLU
    h2 = jnp.dot(h1[:, :H1p], w2, preferred_element_type=jnp.float32) + b2
    h2 = jnp.maximum(h2, 0.0).astype(jnp.bfloat16)
    # fc3 + tanh -> lane-dense (TM, Ap) store; padded action cols sliced in wrapper
    h3 = jnp.dot(h2[:, :H2p], w3, preferred_element_type=jnp.float32) + b3
    o_ref[...] = jnp.tanh(h3[:, :Ap])


@functools.partial(jax.jit, static_argnames=("dims", "action_dim"))
def actor_forward(x, w_cat, b_cat, dims, action_dim):
    """x: (B, statesDim) f32; w_cat/b_cat: packed params from pack_params()."""
    S, H1p, H2p, Ap, Wcat, r2, r3 = dims
    B = x.shape[0]
    assert x.shape[1] == S

    # Single grid step for B <= MAX_TM; otherwise few large tiles. No x padding:
    # a partial last tile reads unspecified rows (never returned) and its
    # out-of-bounds output rows are masked.
    TM = max(SUBLANE, min(_round_up(B, SUBLANE), MAX_TM))
    nb = pl.cdiv(B, TM)
    R = w_cat.shape[0]

    kernel = functools.partial(
        actor_mlp_kernel, S=S, H1p=H1p, H2p=H2p, Ap=Ap, Wcat=Wcat, r2=r2, r3=r3)

    out_padded = pl.pallas_call(
        kernel,
        out_shape=jax.ShapeDtypeStruct((B, Ap), jnp.float32),
        grid=(nb,),
        in_specs=[
            pl.BlockSpec((TM, S), lambda i: (i, 0)),
            # Packed weights / biases: constant block index -> DMA'd once per call,
            # VMEM-resident across all batch tiles.
            pl.BlockSpec((R, Wcat), lambda i: (0, 0)),
            pl.BlockSpec((1, 3 * Wcat), lambda i: (0, 0)),
        ],
        out_specs=pl.BlockSpec((TM, Ap), lambda i: (i, 0)),
        compiler_params=pltpu.CompilerParams(
            dimension_semantics=("arbitrary",)),
    )(x, w_cat, b_cat)

    return out_padded[:, :action_dim]


# ---------------- parameter construction (mirrors the PyTorch module) ----------------

def xavier_uniform(key, fan_in, fan_out):
    # torch.nn.init.xavier_uniform_ bound; stored as (in, out) = W^T of nn.Linear.
    bound = jnp.sqrt(6.0 / (fan_in + fan_out))
    return jax.random.uniform(key, (fan_in, fan_out), jnp.float32, -bound, bound)


def linear_bias(key, fan_in, fan_out):
    # PyTorch default Linear bias init: U(-1/sqrt(fan_in), 1/sqrt(fan_in)).
    bound = 1.0 / jnp.sqrt(jnp.float32(fan_in))
    return jax.random.uniform(key, (1, fan_out), jnp.float32, -bound, bound)


def init_actor_params(key, states_dim, action_dim, hidden1):
    hidden2 = hidden1 - 100  # mirrors the PyTorch __init__
    k = jax.random.split(key, 6)
    return {
        "w1": xavier_uniform(k[0], states_dim, hidden1),
        "b1": linear_bias(k[1], states_dim, hidden1),
        "w2": xavier_uniform(k[2], hidden1, hidden2),
        "b2": linear_bias(k[3], hidden1, hidden2),
        "w3": xavier_uniform(k[4], hidden2, action_dim),
        "b3": linear_bias(k[5], hidden2, action_dim),
    }


def pack_params(params):
    """Pad feature dims to lane multiples and pack into 2 arrays (1 bf16 + 1 f32).

    Returns (w_cat, b_cat, dims):
      w_cat: (S8 + H1p + H2p, Wcat) bf16 = [w1; w2; w3] row-concat, zero-padded.
      b_cat: (1, 3*Wcat) f32 = [b1 | b2 | b3] lane-concat, zero-padded.
      dims:  static tuple (S, H1p, H2p, Ap, Wcat, r2, r3) for the kernel.
    """
    w1, b1 = params["w1"], params["b1"]
    w2, b2 = params["w2"], params["b2"]
    w3, b3 = params["w3"], params["b3"]
    S, H1 = w1.shape
    H2 = w2.shape[1]
    A = w3.shape[1]
    H1p = _round_up(H1, LANE)   # 228 -> 256
    H2p = _round_up(H2, LANE)   # 128 -> 128
    Ap = _round_up(A, LANE)     # 2   -> 128
    Wcat = max(H1p, H2p, Ap)    # common lane width of the packed weight buffer
    S8 = _round_up(S, SUBLANE)  # sublane-aligned row offset for w2

    def pad2(a, rows, cols):
        return jnp.pad(a, ((0, rows - a.shape[0]), (0, cols - a.shape[1])))

    w_cat = jnp.concatenate([
        pad2(w1, S8, Wcat),
        pad2(w2, H1p, Wcat),
        pad2(w3, H2p, Wcat),
    ], axis=0).astype(jnp.bfloat16)

    b_cat = jnp.concatenate([
        pad2(b1, 1, Wcat),
        pad2(b2, 1, Wcat),
        pad2(b3, 1, Wcat),
    ], axis=1)  # (1, 3*Wcat) f32

    dims = (S, H1p, H2p, Ap, Wcat, S8, S8 + H1p)
    return w_cat, b_cat, dims


if __name__ == "__main__":
    # LunarLanderContinuous-style dims: 8 states, 2 actions, hidden 228 -> 128.
    states_dim, action_dim, hidden1 = 8, 2, 228
    batch = 200  # single 200-row grid step (no batch padding, no extra XLA pad op)

    key = jax.random.PRNGKey(0)
    k_params, k_x = jax.random.split(key)
    params = init_actor_params(k_params, states_dim, action_dim, hidden1)
    w_cat, b_cat, dims = pack_params(params)
    x = jax.random.normal(k_x, (batch, states_dim), jnp.float32)

    out = actor_forward(x, w_cat, b_cat, dims, action_dim)
    out = jax.block_until_ready(out)
    assert out.shape == (batch, action_dim)

    # Reference 1: identical math (bf16 MXU inputs, f32 accumulate) in plain JAX.
    xb = x.astype(jnp.bfloat16)
    h = jnp.dot(xb, params["w1"].astype(jnp.bfloat16),
                preferred_element_type=jnp.float32) + params["b1"]
    h = jnp.maximum(h, 0.0).astype(jnp.bfloat16)
    h = jnp.dot(h, params["w2"].astype(jnp.bfloat16),
                preferred_element_type=jnp.float32) + params["b2"]
    h = jnp.maximum(h, 0.0).astype(jnp.bfloat16)
    ref_bf16 = jnp.tanh(jnp.dot(h, params["w3"].astype(jnp.bfloat16),
                                preferred_element_type=jnp.float32) + params["b3"])
    assert jnp.allclose(out, ref_bf16, atol=2e-3, rtol=2e-3)

    # Reference 2: original f32 module semantics (looser tol: bf16 weight rounding).
    h = jnp.maximum(x @ params["w1"] + params["b1"], 0.0)
    h = jnp.maximum(h @ params["w2"] + params["b2"], 0.0)
    ref_f32 = jnp.tanh(h @ params["w3"] + params["b3"])
    assert jnp.allclose(out, ref_f32, atol=5e-2, rtol=5e-2)

    print("KERNEL_OK")
</pallas_src>

<mosaic_0001>
module attributes {stable_mosaic.version = 11 : i64} {
  func.func @actor_mlp_kernel(%arg0: i32, %arg1: memref<200x8xf32, #tpu.memory_space<vmem>>, %arg2: memref<392x256xbf16, #tpu.memory_space<vmem>>, %arg3: memref<1x768xf32, #tpu.memory_space<vmem>>, %arg4: memref<200x128xf32, #tpu.memory_space<vmem>>) attributes {dimension_semantics = [#tpu.dimension_semantics<arbitrary>], iteration_bounds = array<i64: 1>, scalar_prefetch = 0 : i64, scratch_operands = 0 : i64, tpu.core_type = #tpu.core_type<tc>, window_params = [{transform_indices = @transform_0, window_bounds = array<i64: 200, 8>}, {pipeline_mode = #tpu.pipeline_mode<synchronous>, transform_indices = @transform_1, window_bounds = array<i64: 392, 256>}, {pipeline_mode = #tpu.pipeline_mode<synchronous>, transform_indices = @transform_2, window_bounds = array<i64: 1, 768>}, {transform_indices = @transform_3, window_bounds = array<i64: 200, 128>}]} {
    %c0 = arith.constant 0 : index
    %c0_0 = arith.constant 0 : index
    %0 = vector.load %arg1[%c0, %c0_0] : memref<200x8xf32, #tpu.memory_space<vmem>>, vector<200x8xf32>
    %1 = arith.truncf %0 : vector<200x8xf32> to vector<200x8xbf16>
    %c0_1 = arith.constant 0 : index
    %c0_2 = arith.constant 0 : index
    %2 = vector.load %arg2[%c0_1, %c0_2] : memref<392x256xbf16, #tpu.memory_space<vmem>>, vector<8x256xbf16>
    %c8 = arith.constant 8 : index
    %c0_3 = arith.constant 0 : index
    %3 = vector.load %arg2[%c8, %c0_3] : memref<392x256xbf16, #tpu.memory_space<vmem>>, vector<256x256xbf16>
    %c264 = arith.constant 264 : index
    %c0_4 = arith.constant 0 : index
    %4 = vector.load %arg2[%c264, %c0_4] : memref<392x256xbf16, #tpu.memory_space<vmem>>, vector<128x256xbf16>
    %c0_5 = arith.constant 0 : index
    %c0_6 = arith.constant 0 : index
    %5 = vector.load %arg3[%c0_5, %c0_6] : memref<1x768xf32, #tpu.memory_space<vmem>>, vector<1x256xf32>
    %c0_7 = arith.constant 0 : index
    %c256 = arith.constant 256 : index
    %6 = vector.load %arg3[%c0_7, %c256] : memref<1x768xf32, #tpu.memory_space<vmem>>, vector<1x256xf32>
    %c0_8 = arith.constant 0 : index
    %c512 = arith.constant 512 : index
    %7 = vector.load %arg3[%c0_8, %c512] : memref<1x768xf32, #tpu.memory_space<vmem>>, vector<1x256xf32>
    %cst = arith.constant dense<0.000000e+00> : vector<200x256xf32>
    %8 = tpu.matmul %1, %2, %cst {dimension_numbers = #tpu.dot_dimension_numbers<[1], [0], [0], [1], [0, 0, 1, 1], [], []>} : vector<200x8xbf16>, vector<8x256xbf16>, vector<200x256xf32> -> vector<200x256xf32>
    %9 = vector.broadcast %5 : vector<1x256xf32> to vector<200x256xf32>
    %10 = arith.addf %8, %9 : vector<200x256xf32>
    %cst_9 = arith.constant 0.000000e+00 : f32
    %11 = vector.broadcast %cst_9 : f32 to vector<200x256xf32>
    %12 = arith.maximumf %10, %11 : vector<200x256xf32>
    %13 = arith.truncf %12 : vector<200x256xf32> to vector<200x256xbf16>
    %cst_10 = arith.constant dense<0.000000e+00> : vector<200x256xf32>
    %14 = tpu.matmul %13, %3, %cst_10 {dimension_numbers = #tpu.dot_dimension_numbers<[1], [0], [0], [1], [0, 0, 1, 1], [], []>} : vector<200x256xbf16>, vector<256x256xbf16>, vector<200x256xf32> -> vector<200x256xf32>
    %15 = vector.broadcast %6 : vector<1x256xf32> to vector<200x256xf32>
    %16 = arith.addf %14, %15 : vector<200x256xf32>
    %cst_11 = arith.constant 0.000000e+00 : f32
    %17 = vector.broadcast %cst_11 : f32 to vector<200x256xf32>
    %18 = arith.maximumf %16, %17 : vector<200x256xf32>
    %19 = arith.truncf %18 : vector<200x256xf32> to vector<200x256xbf16>
    %20 = vector.extract_strided_slice %19 {offsets = [0, 0], sizes = [200, 128], strides = [1, 1]} : vector<200x256xbf16> to vector<200x128xbf16>
    %cst_12 = arith.constant dense<0.000000e+00> : vector<200x256xf32>
    %21 = tpu.matmul %20, %4, %cst_12 {dimension_numbers = #tpu.dot_dimension_numbers<[1], [0], [0], [1], [0, 0, 1, 1], [], []>} : vector<200x128xbf16>, vector<128x256xbf16>, vector<200x256xf32> -> vector<200x256xf32>
    %22 = vector.broadcast %7 : vector<1x256xf32> to vector<200x256xf32>
    %23 = arith.addf %21, %22 : vector<200x256xf32>
    %24 = vector.extract_strided_slice %23 {offsets = [0, 0], sizes = [200, 128], strides = [1, 1]} : vector<200x256xf32> to vector<200x128xf32>
    %25 = math.tanh %24 : vector<200x128xf32>
    %c0_13 = arith.constant 0 : index
    %c0_14 = arith.constant 0 : index
    %26 = vector.load %arg4[%c0_13, %c0_14] : memref<200x128xf32, #tpu.memory_space<vmem>>, vector<200x128xf32>
    tpu.vector_store %arg4[%c0_13, %c0_14], %25 {strides = array<i32>} : memref<200x128xf32, #tpu.memory_space<vmem>>, vector<200x128xf32>,
    return
  }
  func.func @transform_0(%arg0: i32) -> (i32, i32) {
    %c0_i32 = arith.constant 0 : i32
    %c0_i32_0 = arith.constant 0 : i32
    return %arg0, %c0_i32 : i32, i32
  }
  func.func @transform_1(%arg0: i32) -> (i32, i32) {
    %c0_i32 = arith.constant 0 : i32
    %c0_i32_0 = arith.constant 0 : i32
    %c0_i32_1 = arith.constant 0 : i32
    return %c0_i32, %c0_i32_0 : i32, i32
  }
  func.func @transform_2(%arg0: i32) -> (i32, i32) {
    %c0_i32 = arith.constant 0 : i32
    %c0_i32_0 = arith.constant 0 : i32
    %c0_i32_1 = arith.constant 0 : i32
    return %c0_i32, %c0_i32_0 : i32, i32
  }
  func.func @transform_3(%arg0: i32) -> (i32, i32) {
    %c0_i32 = arith.constant 0 : i32
    %c0_i32_0 = arith.constant 0 : i32
    return %arg0, %c0_i32 : i32, i32
  }
}

</mosaic_0001>

<llo_original>
// kernel: actor_forward.1
$region0: #{actor_forward.1}
  #allocation0 [shape = 'u32[]', space=smem, size = 0x4, offset = 0x4, fixed_abs, tag = 'smem constant byte address 0x4 - core index']
  #allocation1 [shape = 'u32[144,128]{1,0:T(1,128)}', space=vmem, size = 0x12000, scoped, tag = 'internal scratch']
  %s0 = inlined_call_operand.vmem [shape: f32[200,8], index: 0, kind: input, shape index: {}]
  %s1 = inlined_call_operand.hbm [shape: bf16[392,256], index: 1, kind: input, shape index: {}]
  %s2 = inlined_call_operand.vmem [shape: f32[1,768], index: 2, kind: input, shape index: {}]
  %s3 = inlined_call_operand.vmem [shape: f32[200,128], index: 3, kind: output, shape index: {}]
  %s4 = sld [smem:[#allocation0]]
  $region26: #{actor_forward.1} parent=0
    _
  %s6 = ssub.s32 1, %s4
  %s7 = scalar_select 0, %s6, %s4
  $region1: #{actor_forward.1} parent=0
    #allocation2 [shape = 'u8[200704]{0}', space=vmem, size = 0x31000, scoped, tag = 'input window, operand 1, single buffered']
    #allocation3 [shape = 's32[1]{0}', space=sflag, size = 0x4, scoped, tag = 'scoped memory for actor_forward.1']
    %8 = vsyncpa [#allocation3], 0
    // Predicated region
    $region2: #{actor_forward.1} parent=1 // pred_check
      _
    $region3: #{actor_forward.1} parent=1 // pred_check_branch
      %10 = sbr.rel (0) target = $region5
    $region4: #{actor_forward.1} parent=1 // pred_region
      _
    $region5: #{actor_forward.1} parent=1 // pred_fallthru
      _
    // Predicated region
    $region6: #{actor_forward.1} parent=1 // pred_check
      _
    $region7: #{actor_forward.1} parent=1 // pred_check_branch
      %12 = sbr.rel (0) target = $region9
    $region8: #{actor_forward.1} parent=1 // pred_region
      %s14 = ssub.s32 6272, 6272
      %15 = vsyncadd [#allocation3], %s14
      %s16 = sshll.u32 [#allocation2], 4
      %s17 = int_to_ptr.vmem [resolvable:$true] %s16
      %22 = dma.hbm_to_vmem [thread:$0]  %s1, 6272, %s17, [#allocation3], 128, 128, 8
    $region9: #{actor_forward.1} parent=1 // pred_fallthru
      _
    // Predicated region
    $region10: #{actor_forward.1} parent=1 // pred_check
      _
    $region11: #{actor_forward.1} parent=1 // pred_check_branch
      %24 = sbr.rel (0) target = $region13
    $region12: #{actor_forward.1} parent=1 // pred_region
      _
    $region13: #{actor_forward.1} parent=1 // pred_fallthru
      _
    // Predicated region
    $region14: #{actor_forward.1} parent=1 // pred_check
      _
    $region15: #{actor_forward.1} parent=1 // pred_check_branch
      %26 = sbr.rel (0) target = $region17
    $region16: #{actor_forward.1} parent=1 // pred_region
      %27 = dma.done [#allocation3], 6272
    $region17: #{actor_forward.1} parent=1 // pred_fallthru
      _
    %v29 = vld [vmem:[%s0] sm:$0xff]
    %v30 = vld [vmem:[%s0 + $0x8] sm:$0xff]
    %v31 = vld [vmem:[%s0 + $0x10] sm:$0xff]
    %v32 = vld [vmem:[%s0 + $0x18] sm:$0xff]
    %v33 = vld [vmem:[%s0 + $0x20] sm:$0xff]
    %v34 = vld [vmem:[%s0 + $0x28] sm:$0xff]
    %v35 = vld [vmem:[%s0 + $0x30] sm:$0xff]
    %v36 = vld [vmem:[%s0 + $0x38] sm:$0xff]
    %v37 = vld [vmem:[%s0 + $0x40] sm:$0xff]
    %v38 = vld [vmem:[%s0 + $0x48] sm:$0xff]
    %v39 = vld [vmem:[%s0 + $0x50] sm:$0xff]
    %v40 = vld [vmem:[%s0 + $0x58] sm:$0xff]
    %v41 = vld [vmem:[%s0 + $0x60] sm:$0xff]
    %v42 = vld [vmem:[%s0 + $0x68] sm:$0xff]
    %v43 = vld [vmem:[%s0 + $0x70] sm:$0xff]
    %v44 = vld [vmem:[%s0 + $0x78] sm:$0xff]
    %v45 = vld [vmem:[%s0 + $0x80] sm:$0xff]
    %v46 = vld [vmem:[%s0 + $0x88] sm:$0xff]
    %v47 = vld [vmem:[%s0 + $0x90] sm:$0xff]
    %v48 = vld [vmem:[%s0 + $0x98] sm:$0xff]
    %v49 = vld [vmem:[%s0 + $0xa0] sm:$0xff]
    %v50 = vld [vmem:[%s0 + $0xa8] sm:$0xff]
    %v51 = vld [vmem:[%s0 + $0xb0] sm:$0xff]
    %v52 = vld [vmem:[%s0 + $0xb8] sm:$0xff]
    %v53 = vld [vmem:[%s0 + $0xc0] sm:$0xff]
    %v54 = vpack.c.bf16 %v30, %v29
    %v55 = vpack.c.bf16 %v32, %v31
    %v56 = vpack.c.bf16 %v34, %v33
    %v57 = vpack.c.bf16 %v36, %v35
    %v58 = vpack.c.bf16 %v38, %v37
    %v59 = vpack.c.bf16 %v40, %v39
    %v60 = vpack.c.bf16 %v42, %v41
    %v61 = vpack.c.bf16 %v44, %v43
    %v62 = vpack.c.bf16 %v46, %v45
    %v63 = vpack.c.bf16 %v48, %v47
    %v64 = vpack.c.bf16 %v50, %v49
    %v65 = vpack.c.bf16 %v52, %v51
    %v66 = vpack.c.bf16 %v53, %v53
    %v67 = vld [vmem:[#allocation2] sm:$0xff]
    %v68 = vld [vmem:[#allocation2 + $0x8] sm:$0xff]
    %v69 = vld [vmem:[#allocation2 + $0x10] sm:$0xff]
    %v70 = vld [vmem:[#allocation2 + $0x18] sm:$0xff]
    %v71 = vld [vmem:[#allocation2 + $0x20] sm:$0xff]
    %v72 = vld [vmem:[#allocation2 + $0x28] sm:$0xff]
    %v73 = vld [vmem:[#allocation2 + $0x30] sm:$0xff]
    %v74 = vld [vmem:[#allocation2 + $0x38] sm:$0xff]
    %v75 = vld [vmem:[#allocation2 + $0x40] sm:$0xff]
    %v76 = vld [vmem:[#allocation2 + $0x48] sm:$0xff]
    %v77 = vld [vmem:[#allocation2 + $0x50] sm:$0xff]
    %v78 = vld [vmem:[#allocation2 + $0x58] sm:$0xff]
    %v79 = vld [vmem:[#allocation2 + $0x60] sm:$0xff]
    %v80 = vld [vmem:[#allocation2 + $0x68] sm:$0xff]
    %v81 = vld [vmem:[#allocation2 + $0x70] sm:$0xff]
    %v82 = vld [vmem:[#allocation2 + $0x78] sm:$0xff]
    %v83 = vld [vmem:[#allocation2 + $0x80] sm:$0xff]
    %v84 = vld [vmem:[#allocation2 + $0x88] sm:$0xff]
    %v85 = vld [vmem:[#allocation2 + $0x90] sm:$0xff]
    %v86 = vld [vmem:[#allocation2 + $0x98] sm:$0xff]
    %v87 = vld [vmem:[#allocation2 + $0xa0] sm:$0xff]
    %v88 = vld [vmem:[#allocation2 + $0xa8] sm:$0xff]
    %v89 = vld [vmem:[#allocation2 + $0xb0] sm:$0xff]
    %v90 = vld [vmem:[#allocation2 + $0xb8] sm:$0xff]
    %v91 = vld [vmem:[#allocation2 + $0xc0] sm:$0xff]
    %v92 = vld [vmem:[#allocation2 + $0xc8] sm:$0xff]
    %v93 = vld [vmem:[#allocation2 + $0xd0] sm:$0xff]
    %v94 = vld [vmem:[#allocation2 + $0xd8] sm:$0xff]
    %v95 = vld [vmem:[#allocation2 + $0xe0] sm:$0xff]
    %v96 = vld [vmem:[#allocation2 + $0xe8] sm:$0xff]
    %v97 = vld [vmem:[#allocation2 + $0xf0] sm:$0xff]
    %v98 = vld [vmem:[#allocation2 + $0xf8] sm:$0xff]
    %v99 = vld [vmem:[#allocation2 + $0x100] sm:$0xff]
    %v100 = vld [vmem:[#allocation2 + $0x108] sm:$0xff]
    %v101 = vld [vmem:[#allocation2 + $0x110] sm:$0xff]
    %v102 = vld [vmem:[#allocation2 + $0x118] sm:$0xff]
    %v103 = vld [vmem:[#allocation2 + $0x120] sm:$0xff]
    %v104 = vld [vmem:[#allocation2 + $0x128] sm:$0xff]
    %v105 = vld [vmem:[#allocation2 + $0x130] sm:$0xff]
    %v106 = vld [vmem:[#allocation2 + $0x138] sm:$0xff]
    %v107 = vld [vmem:[#allocation2 + $0x140] sm:$0xff]
    %v108 = vld [vmem:[#allocation2 + $0x148] sm:$0xff]
    %v109 = vld [vmem:[#allocation2 + $0x150] sm:$0xff]
    %v110 = vld [vmem:[#allocation2 + $0x158] sm:$0xff]
    %v111 = vld [vmem:[#allocation2 + $0x160] sm:$0xff]
    %v112 = vld [vmem:[#allocation2 + $0x168] sm:$0xff]
    %v113 = vld [vmem:[#allocation2 + $0x170] sm:$0xff]
    %v114 = vld [vmem:[#allocation2 + $0x178] sm:$0xff]
    %v115 = vld [vmem:[#allocation2 + $0x180] sm:$0xff]
    %v116 = vld [vmem:[%s2] sm:$0x3]
    %v117 = vld [vmem:[%s2 + $0x2] sm:$0x3]
    %v118 = vld [vmem:[%s2 + $0x4] sm:$0x3]
    %v120 = vlaneseq
    %v121 = vshrl.u32 %v120, 7
    %v122 = vsub.s32 0, %v121
    %v123 = vrot.slane %v116, %v122
    %v124 = vlaneseq
    %v125 = vshrl.u32 %v124, 7
    %v126 = vsub.s32 1, %v125
    %v127 = vrot.slane %v116, %v126
    %v131 = vunpack.c.l.b16 %v67
    %v132 = vunpack.c.h.b16 %v67
    %v133 = vpack.c.b16 %v131, %v131
    %v134 = vpack.c.b16 %v132, %v132
    %vm135 = vcmask 64512
    %v137 = vsel %vm135, %v54, 0
    %v140 = vsel %vm135, %v55, 0
    %v143 = vsel %vm135, %v56, 0
    %v146 = vsel %vm135, %v57, 0
    %v149 = vsel %vm135, %v58, 0
    %v152 = vsel %vm135, %v59, 0
    %v155 = vsel %vm135, %v60, 0
    %v158 = vsel %vm135, %v61, 0
    %v161 = vsel %vm135, %v62, 0
    %v164 = vsel %vm135, %v63, 0
    %v167 = vsel %vm135, %v64, 0
    %v170 = vsel %vm135, %v65, 0
    %v173 = vsel %vm135, %v66, 0
    %vm175 = vcmask 1043456
    %v177 = vsel %vm175, %v133, 0
    %v180 = vsel %vm175, %v134, 0
    %182 = vmatprep.subr.bf16.mxu0 %v180
    %183 = vmatpush1.bf16.msra.mxu0 %v177
    %184 = vmatprep.subr.bf16.mxu0 0
    %185 = vmatpush1.bf16.msra.mxu0 0
    %186 = vmatprep.subr.bf16.mxu0 0
    %187 = vmatpush1.bf16.msra.mxu0 0
    %188 = vmatprep.subr.bf16.mxu0 0
    %189 = vmatpush1.bf16.msra.mxu0 0
    %190 = vmatprep.subr.bf16.mxu0 0
    %191 = vmatpush1.bf16.msra.mxu0 0
    %192 = vmatprep.subr.bf16.mxu0 0
    %193 = vmatpush1.bf16.msra.mxu0 0
    %194 = vmatprep.subr.bf16.mxu0 0
    %195 = vmatpush1.bf16.msra.mxu0 0
    %196 = vmatprep.subr.bf16.mxu0 0
    %197 = vmatpush1.bf16.msra.mxu0 0
    %198 = vmatprep.subr.bf16.mxu0 0
    %199 = vmatpush1.bf16.msra.mxu0 0
    %200 = vmatprep.subr.bf16.mxu0 0
    %201 = vmatpush1.bf16.msra.mxu0 0
    %202 = vmatprep.subr.bf16.mxu0 0
    %203 = vmatpush1.bf16.msra.mxu0 0
    %204 = vmatprep.subr.bf16.mxu0 0
    %205 = vmatpush1.bf16.msra.mxu0 0
    %206 = vmatprep.subr.bf16.mxu0 0
    %207 = vmatpush1.bf16.msra.mxu0 0
    %208 = vmatprep.subr.bf16.mxu0 0
    %209 = vmatpush1.bf16.msra.mxu0 0
    %210 = vmatprep.subr.bf16.mxu0 0
    %211 = vmatpush1.bf16.msra.mxu0 0
    %212 = vmatprep.subr.bf16.mxu0 0
    %213 = vmatpush1.bf16.msra.mxu0 0
    %214 = vmatprep.mubr.bf16.mxu0 0
    %215 = vmatmul.mubr.bf16.gmra.mrb[0].mxu0 %v137
    %v216 = vpop.f32.mrb[0].mxu0
    %v217 = vadd.f32 %v123, %v216
    %v218 = vpop.f32.mrb[0].mxu0
    %v219 = vadd.f32 %v127, %v218
    %v220 = vpop.f32.mrb[0].mxu0
    %v221 = vadd.f32 %v123, %v220
    %v222 = vpop.f32.mrb[0].mxu0
    %v223 = vadd.f32 %v127, %v222
    %224 = vmatprep.mubr.bf16.mxu0 0
    %225 = vmatmul.mubr.bf16.gmra.mrb[0].mxu0 %v140
    %v226 = vpop.f32.mrb[0].mxu0
    %v227 = vadd.f32 %v123, %v226
    %v228 = vpop.f32.mrb[0].mxu0
    %v229 = vadd.f32 %v127, %v228
    %v230 = vpop.f32.mrb[0].mxu0
    %v231 = vadd.f32 %v123, %v230
    %v232 = vpop.f32.mrb[0].mxu0
    %v233 = vadd.f32 %v127, %v232
    %234 = vmatprep.mubr.bf16.mxu0 0
    %235 = vmatmul.mubr.bf16.gmra.mrb[0].mxu0 %v143
    %v236 = vpop.f32.mrb[0].mxu0
    %v237 = vadd.f32 %v123, %v236
    %v238 = vpop.f32.mrb[0].mxu0
    %v239 = vadd.f32 %v127, %v238
    %v240 = vpop.f32.mrb[0].mxu0
    %v241 = vadd.f32 %v123, %v240
    %v242 = vpop.f32.mrb[0].mxu0
    %v243 = vadd.f32 %v127, %v242
    %244 = vmatprep.mubr.bf16.mxu0 0
    %245 = vmatmul.mubr.bf16.gmra.mrb[0].mxu0 %v146
    %v246 = vpop.f32.mrb[0].mxu0
    %v247 = vadd.f32 %v123, %v246
    %v248 = vpop.f32.mrb[0].mxu0
    %v249 = vadd.f32 %v127, %v248
    %v250 = vpop.f32.mrb[0].mxu0
    %v251 = vadd.f32 %v123, %v250
    %v252 = vpop.f32.mrb[0].mxu0
    %v253 = vadd.f32 %v127, %v252
    %254 = vmatprep.mubr.bf16.mxu0 0
    %255 = vmatmul.mubr.bf16.gmra.mrb[0].mxu0 %v149
    %v256 = vpop.f32.mrb[0].mxu0
    %v257 = vadd.f32 %v123, %v256
    %v258 = vpop.f32.mrb[0].mxu0
    %v259 = vadd.f32 %v127, %v258
    %v260 = vpop.f32.mrb[0].mxu0
    %v261 = vadd.f32 %v123, %v260
    %v262 = vpop.f32.mrb[0].mxu0
    %v263 = vadd.f32 %v127, %v262
    %264 = vmatprep.mubr.bf16.mxu0 0
    %265 = vmatmul.mubr.bf16.gmra.mrb[0].mxu0 %v152
    %v266 = vpop.f32.mrb[0].mxu0
    %v267 = vadd.f32 %v123, %v266
    %v268 = vpop.f32.mrb[0].mxu0
    %v269 = vadd.f32 %v127, %v268
    %v270 = vpop.f32.mrb[0].mxu0
    %v271 = vadd.f32 %v123, %v270
    %v272 = vpop.f32.mrb[0].mxu0
    %v273 = vadd.f32 %v127, %v272
    %274 = vmatprep.mubr.bf16.mxu0 0
    %275 = vmatmul.mubr.bf16.gmra.mrb[0].mxu0 %v155
    %v276 = vpop.f32.mrb[0].mxu0
    %v277 = vadd.f32 %v123, %v276
    %v278 = vpop.f32.mrb[0].mxu0
    %v279 = vadd.f32 %v127, %v278
    %v280 = vpop.f32.mrb[0].mxu0
    %v281 = vadd.f32 %v123, %v280
    %v282 = vpop.f32.mrb[0].mxu0
    %v283 = vadd.f32 %v127, %v282
    %284 = vmatprep.mubr.bf16.mxu0 0
    %285 = vmatmul.mubr.bf16.gmra.mrb[0].mxu0 %v158
    %v286 = vpop.f32.mrb[0].mxu0
    %v287 = vadd.f32 %v123, %v286
    %v288 = vpop.f32.mrb[0].mxu0
    %v289 = vadd.f32 %v127, %v288
    %v290 = vpop.f32.mrb[0].mxu0
    %v291 = vadd.f32 %v123, %v290
    %v292 = vpop.f32.mrb[0].mxu0
    %v293 = vadd.f32 %v127, %v292
    %294 = vmatprep.mubr.bf16.mxu0 0
    %295 = vmatmul.mubr.bf16.gmra.mrb[0].mxu0 %v161
    %v296 = vpop.f32.mrb[0].mxu0
    %v297 = vadd.f32 %v123, %v296
    %v298 = vpop.f32.mrb[0].mxu0
    %v299 = vadd.f32 %v127, %v298
    %v300 = vpop.f32.mrb[0].mxu0
    %v301 = vadd.f32 %v123, %v300
    %v302 = vpop.f32.mrb[0].mxu0
    %v303 = vadd.f32 %v127, %v302
    %304 = vmatprep.mubr.bf16.mxu0 0
    %305 = vmatmul.mubr.bf16.gmra.mrb[0].mxu0 %v164
    %v306 = vpop.f32.mrb[0].mxu0
    %v307 = vadd.f32 %v123, %v306
    %v308 = vpop.f32.mrb[0].mxu0
    %v309 = vadd.f32 %v127, %v308
    %v310 = vpop.f32.mrb[0].mxu0
    %v311 = vadd.f32 %v123, %v310
    %v312 = vpop.f32.mrb[0].mxu0
    %v313 = vadd.f32 %v127, %v312
    %314 = vmatprep.mubr.bf16.mxu0 0
    %315 = vmatmul.mubr.bf16.gmra.mrb[0].mxu0 %v167
    %v316 = vpop.f32.mrb[0].mxu0
    %v317 = vadd.f32 %v123, %v316
    %v318 = vpop.f32.mrb[0].mxu0
    %v319 = vadd.f32 %v127, %v318
    %v320 = vpop.f32.mrb[0].mxu0
    %v321 = vadd.f32 %v123, %v320
    %v322 = vpop.f32.mrb[0].mxu0
    %v323 = vadd.f32 %v127, %v322
    %324 = vmatprep.mubr.bf16.mxu0 0
    %325 = vmatmul.mubr.bf16.gmra.mrb[0].mxu0 %v170
    %v326 = vpop.f32.mrb[0].mxu0
    %v327 = vadd.f32 %v123, %v326
    %v328 = vpop.f32.mrb[0].mxu0
    %v329 = vadd.f32 %v127, %v328
    %v330 = vpop.f32.mrb[0].mxu0
    %v331 = vadd.f32 %v123, %v330
    %v332 = vpop.f32.mrb[0].mxu0
    %v333 = vadd.f32 %v127, %v332
    %334 = vmatprep.mubr.bf16.mxu0 0
    %335 = vmatmul.mubr.bf16.gmra.mrb[0].mxu0 %v173
    %v336 = vpop.f32.mrb[0].mxu0
    %v337 = vadd.f32 %v123, %v336
    %v338 = vpop.f32.mrb[0].mxu0
    %v339 = vadd.f32 %v127, %v338
    %v340 = vpop.f32.mrb[0].mxu0
    %v341 = vpop.f32.mrb[0].mxu0
    %342 = vdwg.mxu0
    %v343 = vmax.f32 %v217, 0.0
    %v344 = vmax.f32 %v219, 0.0
    %v345 = vmax.f32 %v221, 0.0
    %v346 = vmax.f32 %v223, 0.0
    %v347 = vmax.f32 %v227, 0.0
    %v348 = vmax.f32 %v229, 0.0
    %v349 = vmax.f32 %v231, 0.0
    %v350 = vmax.f32 %v233, 0.0
    %v351 = vmax.f32 %v237, 0.0
    %v352 = vmax.f32 %v239, 0.0
    %v353 = vmax.f32 %v241, 0.0
    %v354 = vmax.f32 %v243, 0.0
    %v355 = vmax.f32 %v247, 0.0
    %v356 = vmax.f32 %v249, 0.0
    %v357 = vmax.f32 %v251, 0.0
    %v358 = vmax.f32 %v253, 0.0
    %v359 = vmax.f32 %v257, 0.0
    %v360 = vmax.f32 %v259, 0.0
    %v361 = vmax.f32 %v261, 0.0
    %v362 = vmax.f32 %v263, 0.0
    %v363 = vmax.f32 %v267, 0.0
    %v364 = vmax.f32 %v269, 0.0
    %v365 = vmax.f32 %v271, 0.0
    %v366 = vmax.f32 %v273, 0.0
    %v367 = vmax.f32 %v277, 0.0
    %v368 = vmax.f32 %v279, 0.0
    %v369 = vmax.f32 %v281, 0.0
    %v370 = vmax.f32 %v283, 0.0
    %v371 = vmax.f32 %v287, 0.0
    %v372 = vmax.f32 %v289, 0.0
    %v373 = vmax.f32 %v291, 0.0
    %v374 = vmax.f32 %v293, 0.0
    %v375 = vmax.f32 %v297, 0.0
    %v376 = vmax.f32 %v299, 0.0
    %v377 = vmax.f32 %v301, 0.0
    %v378 = vmax.f32 %v303, 0.0
    %v379 = vmax.f32 %v307, 0.0
    %v380 = vmax.f32 %v309, 0.0
    %v381 = vmax.f32 %v311, 0.0
    %v382 = vmax.f32 %v313, 0.0
    %v383 = vmax.f32 %v317, 0.0
    %v384 = vmax.f32 %v319, 0.0
    %v385 = vmax.f32 %v321, 0.0
    %v386 = vmax.f32 %v323, 0.0
    %v387 = vmax.f32 %v327, 0.0
    %v388 = vmax.f32 %v329, 0.0
    %v389 = vmax.f32 %v331, 0.0
    %v390 = vmax.f32 %v333, 0.0
    %v391 = vmax.f32 %v337, 0.0
    %v392 = vmax.f32 %v339, 0.0
    %v393 = vpack.c.bf16 %v345, %v343
    %v394 = vpack.c.bf16 %v346, %v344
    %v395 = vpack.c.bf16 %v349, %v347
    %v396 = vpack.c.bf16 %v350, %v348
    %v397 = vpack.c.bf16 %v353, %v351
    %v398 = vpack.c.bf16 %v354, %v352
    %v399 = vpack.c.bf16 %v357, %v355
    %v400 = vpack.c.bf16 %v358, %v356
    %v401 = vpack.c.bf16 %v361, %v359
    %v402 = vpack.c.bf16 %v362, %v360
    %v403 = vpack.c.bf16 %v365, %v363
    %v404 = vpack.c.bf16 %v366, %v364
    %v405 = vpack.c.bf16 %v369, %v367
    %v406 = vpack.c.bf16 %v370, %v368
    %v407 = vpack.c.bf16 %v373, %v371
    %v408 = vpack.c.bf16 %v374, %v372
    %v409 = vpack.c.bf16 %v377, %v375
    %v410 = vpack.c.bf16 %v378, %v376
    %v411 = vpack.c.bf16 %v381, %v379
    %v412 = vpack.c.bf16 %v382, %v380
    %v413 = vpack.c.bf16 %v385, %v383
    %v414 = vpack.c.bf16 %v386, %v384
    %v415 = vpack.c.bf16 %v389, %v387
    %v416 = vpack.c.bf16 %v390, %v388
    %v417 = vpack.c.bf16 %v391, %v391
    %v418 = vpack.c.bf16 %v392, %v392
    %v420 = vlaneseq
    %v421 = vshrl.u32 %v420, 7
    %v422 = vsub.s32 0, %v421
    %v423 = vrot.slane %v117, %v422
    %v457 = vunpack.c.l.b16 %v68
    %v458 = vunpack.c.h.b16 %v68
    %v459 = vunpack.c.l.b16 %v69
    %v460 = vunpack.c.h.b16 %v69
    %v461 = vunpack.c.l.b16 %v70
    %v462 = vunpack.c.h.b16 %v70
    %v463 = vunpack.c.l.b16 %v71
    %v464 = vunpack.c.h.b16 %v71
    %v465 = vunpack.c.l.b16 %v72
    %v466 = vunpack.c.h.b16 %v72
    %v467 = vunpack.c.l.b16 %v73
    %v468 = vunpack.c.h.b16 %v73
    %v469 = vunpack.c.l.b16 %v74
    %v470 = vunpack.c.h.b16 %v74
    %v471 = vunpack.c.l.b16 %v75
    %v472 = vunpack.c.h.b16 %v75
    %v473 = vunpack.c.l.b16 %v76
    %v474 = vunpack.c.h.b16 %v76
    %v475 = vunpack.c.l.b16 %v77
    %v476 = vunpack.c.h.b16 %v77
    %v477 = vunpack.c.l.b16 %v78
    %v478 = vunpack.c.h.b16 %v78
    %v479 = vunpack.c.l.b16 %v79
    %v480 = vunpack.c.h.b16 %v79
    %v481 = vunpack.c.l.b16 %v80
    %v482 = vunpack.c.h.b16 %v80
    %v483 = vunpack.c.l.b16 %v81
    %v484 = vunpack.c.h.b16 %v81
    %v485 = vunpack.c.l.b16 %v82
    %v486 = vunpack.c.h.b16 %v82
    %v487 = vunpack.c.l.b16 %v83
    %v488 = vunpack.c.h.b16 %v83
    %v489 = vunpack.c.l.b16 %v84
    %v490 = vunpack.c.h.b16 %v84
    %v491 = vunpack.c.l.b16 %v85
    %v492 = vunpack.c.h.b16 %v85
    %v493 = vunpack.c.l.b16 %v86
    %v494 = vunpack.c.h.b16 %v86
    %v495 = vunpack.c.l.b16 %v87
    %v496 = vunpack.c.h.b16 %v87
    %v497 = vunpack.c.l.b16 %v88
    %v498 = vunpack.c.h.b16 %v88
    %v499 = vunpack.c.l.b16 %v89
    %v500 = vunpack.c.h.b16 %v89
    %v501 = vunpack.c.l.b16 %v90
    %v502 = vunpack.c.h.b16 %v90
    %v503 = vunpack.c.l.b16 %v91
    %v504 = vunpack.c.h.b16 %v91
    %v505 = vunpack.c.l.b16 %v92
    %v506 = vunpack.c.h.b16 %v92
    %v507 = vunpack.c.l.b16 %v93
    %v508 = vunpack.c.h.b16 %v93
    %v509 = vunpack.c.l.b16 %v94
    %v510 = vunpack.c.h.b16 %v94
    %v511 = vunpack.c.l.b16 %v95
    %v512 = vunpack.c.h.b16 %v95
    %v513 = vunpack.c.l.b16 %v96
    %v514 = vunpack.c.h.b16 %v96
    %v515 = vunpack.c.l.b16 %v97
    %v516 = vunpack.c.h.b16 %v97
    %v517 = vunpack.c.l.b16 %v98
    %v518 = vunpack.c.h.b16 %v98
    %v519 = vunpack.c.l.b16 %v99
    %v520 = vunpack.c.h.b16 %v99
    %v521 = vpack.c.b16 %v459, %v457
    %v522 = vpack.c.b16 %v460, %v458
    %v523 = vpack.c.b16 %v463, %v461
    %v524 = vpack.c.b16 %v464, %v462
    %v525 = vpack.c.b16 %v467, %v465
    %v526 = vpack.c.b16 %v468, %v466
    %v527 = vpack.c.b16 %v471, %v469
    %v528 = vpack.c.b16 %v472, %v470
    %v529 = vpack.c.b16 %v475, %v473
    %v530 = vpack.c.b16 %v476, %v474
    %v531 = vpack.c.b16 %v479, %v477
    %v532 = vpack.c.b16 %v480, %v478
    %v533 = vpack.c.b16 %v483, %v481
    %v534 = vpack.c.b16 %v484, %v482
    %v535 = vpack.c.b16 %v487, %v485
    %v536 = vpack.c.b16 %v488, %v486
    %v537 = vpack.c.b16 %v491, %v489
    %v538 = vpack.c.b16 %v492, %v490
    %v539 = vpack.c.b16 %v495, %v493
    %v540 = vpack.c.b16 %v496, %v494
    %v541 = vpack.c.b16 %v499, %v497
    %v542 = vpack.c.b16 %v500, %v498
    %v543 = vpack.c.b16 %v503, %v501
    %v544 = vpack.c.b16 %v504, %v502
    %v545 = vpack.c.b16 %v507, %v505
    %v546 = vpack.c.b16 %v508, %v506
    %v547 = vpack.c.b16 %v511, %v509
    %v548 = vpack.c.b16 %v512, %v510
    %v549 = vpack.c.b16 %v515, %v513
    %v550 = vpack.c.b16 %v516, %v514
    %v551 = vpack.c.b16 %v519, %v517
    %v552 = vpack.c.b16 %v520, %v518
    %585 = vmatprep.subr.bf16.mxu0 %v522
    %586 = vmatpush1.bf16.msra.mxu0 %v521
    %587 = vmatprep.subr.bf16.mxu0 %v524
    %588 = vmatpush1.bf16.msra.mxu0 %v523
    %589 = vmatprep.subr.bf16.mxu0 %v526
    %590 = vmatpush1.bf16.msra.mxu0 %v525
    %591 = vmatprep.subr.bf16.mxu0 %v528
    %592 = vmatpush1.bf16.msra.mxu0 %v527
    %593 = vmatprep.subr.bf16.mxu0 %v530
    %594 = vmatpush1.bf16.msra.mxu0 %v529
    %595 = vmatprep.subr.bf16.mxu0 %v532
    %596 = vmatpush1.bf16.msra.mxu0 %v531
    %597 = vmatprep.subr.bf16.mxu0 %v534
    %598 = vmatpush1.bf16.msra.mxu0 %v533
    %599 = vmatprep.subr.bf16.mxu0 %v536
    %600 = vmatpush1.bf16.msra.mxu0 %v535
    %601 = vmatprep.subr.bf16.mxu0 %v538
    %602 = vmatpush1.bf16.msra.mxu0 %v537
    %603 = vmatprep.subr.bf16.mxu0 %v540
    %604 = vmatpush1.bf16.msra.mxu0 %v539
    %605 = vmatprep.subr.bf16.mxu0 %v542
    %606 = vmatpush1.bf16.msra.mxu0 %v541
    %607 = vmatprep.subr.bf16.mxu0 %v544
    %608 = vmatpush1.bf16.msra.mxu0 %v543
    %609 = vmatprep.subr.bf16.mxu0 %v546
    %610 = vmatpush1.bf16.msra.mxu0 %v545
    %611 = vmatprep.subr.bf16.mxu0 %v548
    %612 = vmatpush1.bf16.msra.mxu0 %v547
    %613 = vmatprep.subr.bf16.mxu0 %v550
    %614 = vmatpush1.bf16.msra.mxu0 %v549
    %615 = vmatprep.subr.bf16.mxu0 %v552
    %616 = vmatpush1.bf16.msra.mxu0 %v551
    %617 = vmatprep.mubr.bf16.mxu0 %v394
    %618 = vmatmul.mubr.bf16.gmra.mrb[0].mxu0 %v393
    %v619 = vpop.f32.mrb[0].mxu0
    %v620 = vadd.f32 %v423, %v619
    %v621 = vpop.f32.mrb[0].mxu0
    %v622 = vpop.f32.mrb[0].mxu0
    %v623 = vadd.f32 %v423, %v622
    %v624 = vpop.f32.mrb[0].mxu0
    %625 = vmatprep.mubr.bf16.mxu0 %v396
    %626 = vmatmul.mubr.bf16.gmra.mrb[0].mxu0 %v395
    %v627 = vpop.f32.mrb[0].mxu0
    %v628 = vadd.f32 %v423, %v627
    %v629 = vpop.f32.mrb[0].mxu0
    %v630 = vpop.f32.mrb[0].mxu0
    %v631 = vadd.f32 %v423, %v630
    %v632 = vpop.f32.mrb[0].mxu0
    %633 = vmatprep.mubr.bf16.mxu0 %v398
    %634 = vmatmul.mubr.bf16.gmra.mrb[0].mxu0 %v397
    %v635 = vpop.f32.mrb[0].mxu0
    %v636 = vadd.f32 %v423, %v635
    %v637 = vpop.f32.mrb[0].mxu0
    %v638 = vpop.f32.mrb[0].mxu0
    %v639 = vadd.f32 %v423, %v638
    %v640 = vpop.f32.mrb[0].mxu0
    %641 = vmatprep.mubr.bf16.mxu0 %v400
    %642 = vmatmul.mubr.bf16.gmra.mrb[0].mxu0 %v399
    %v643 = vpop.f32.mrb[0].mxu0
    %v644 = vadd.f32 %v423, %v643
    %v645 = vpop.f32.mrb[0].mxu0
    %v646 = vpop.f32.mrb[0].mxu0
    %v647 = vadd.f32 %v423, %v646
    %v648 = vpop.f32.mrb[0].mxu0
    %649 = vmatprep.mubr.bf16.mxu0 %v402
    %650 = vmatmul.mubr.bf16.gmra.mrb[0].mxu0 %v401
    %v651 = vpop.f32.mrb[0].mxu0
    %v652 = vadd.f32 %v423, %v651
    %v653 = vpop.f32.mrb[0].mxu0
    %v654 = vpop.f32.mrb[0].mxu0
    %v655 = vadd.f32 %v423, %v654
    %v656 = vpop.f32.mrb[0].mxu0
    %657 = vmatprep.mubr.bf16.mxu0 %v404
    %658 = vmatmul.mubr.bf16.gmra.mrb[0].mxu0 %v403
    %v659 = vpop.f32.mrb[0].mxu0
    %v660 = vadd.f32 %v423, %v659
    %v661 = vpop.f32.mrb[0].mxu0
    %v662 = vpop.f32.mrb[0].mxu0
    %v663 = vadd.f32 %v423, %v662
    %v664 = vpop.f32.mrb[0].mxu0
    %665 = vmatprep.mubr.bf16.mxu0 %v406
    %666 = vmatmul.mubr.bf16.gmra.mrb[0].mxu0 %v405
    %v667 = vpop.f32.mrb[0].mxu0
    %v668 = vadd.f32 %v423, %v667
    %v669 = vpop.f32.mrb[0].mxu0
    %v670 = vpop.f32.mrb[0].mxu0
    %v671 = vadd.f32 %v423, %v670
    %v672 = vpop.f32.mrb[0].mxu0
    %673 = vmatprep.mubr.bf16.mxu0 %v408
    %674 = vmatmul.mubr.bf16.gmra.mrb[0].mxu0 %v407
    %v675 = vpop.f32.mrb[0].mxu0
    %v676 = vadd.f32 %v423, %v675
    %v677 = vpop.f32.mrb[0].mxu0
    %v678 = vpop.f32.mrb[0].mxu0
    %v679 = vadd.f32 %v423, %v678
    %v680 = vpop.f32.mrb[0].mxu0
    %681 = vmatprep.mubr.bf16.mxu0 %v410
    %682 = vmatmul.mubr.bf16.gmra.mrb[0].mxu0 %v409
    %v683 = vpop.f32.mrb[0].mxu0
    %v684 = vadd.f32 %v423, %v683
    %v685 = vpop.f32.mrb[0].mxu0
    %v686 = vpop.f32.mrb[0].mxu0
    %v687 = vadd.f32 %v423, %v686
    %v688 = vpop.f32.mrb[0].mxu0
    %689 = vmatprep.mubr.bf16.mxu0 %v412
    %690 = vmatmul.mubr.bf16.gmra.mrb[0].mxu0 %v411
    %v691 = vpop.f32.mrb[0].mxu0
    %v692 = vadd.f32 %v423, %v691
    %v693 = vpop.f32.mrb[0].mxu0
    %v694 = vpop.f32.mrb[0].mxu0
    %v695 = vadd.f32 %v423, %v694
    %v696 = vpop.f32.mrb[0].mxu0
    %697 = vmatprep.mubr.bf16.mxu0 %v414
    %698 = vmatmul.mubr.bf16.gmra.mrb[0].mxu0 %v413
    %v699 = vpop.f32.mrb[0].mxu0
    %v700 = vadd.f32 %v423, %v699
    %v701 = vpop.f32.mrb[0].mxu0
    %v702 = vpop.f32.mrb[0].mxu0
    %v703 = vadd.f32 %v423, %v702
    %v704 = vpop.f32.mrb[0].mxu0
    %705 = vmatprep.mubr.bf16.mxu0 %v416
    %706 = vmatmul.mubr.bf16.gmra.mrb[0].mxu0 %v415
    %v707 = vpop.f32.mrb[0].mxu0
    %v708 = vadd.f32 %v423, %v707
    %v709 = vpop.f32.mrb[0].mxu0
    %v710 = vpop.f32.mrb[0].mxu0
    %v711 = vadd.f32 %v423, %v710
    %v712 = vpop.f32.mrb[0].mxu0
    %713 = vmatprep.mubr.bf16.mxu0 %v418
    %714 = vmatmul.mubr.bf16.gmra.mrb[0].mxu0 %v417
    %v715 = vpop.f32.mrb[0].mxu0
    %v716 = vadd.f32 %v423, %v715
    %v717 = vpop.f32.mrb[0].mxu0
    %v718 = vpop.f32.mrb[0].mxu0
    %v719 = vpop.f32.mrb[0].mxu0
    %720 = vdwg.mxu0
    %v721 = vmax.f32 %v620, 0.0
    %v722 = vmax.f32 %v623, 0.0
    %v723 = vmax.f32 %v628, 0.0
    %v724 = vmax.f32 %v631, 0.0
    %v725 = vmax.f32 %v636, 0.0
    %v726 = vmax.f32 %v639, 0.0
    %v727 = vmax.f32 %v644, 0.0
    %v728 = vmax.f32 %v647, 0.0
    %v729 = vmax.f32 %v652, 0.0
    %v730 = vmax.f32 %v655, 0.0
    %v731 = vmax.f32 %v660, 0.0
    %v732 = vmax.f32 %v663, 0.0
    %v733 = vmax.f32 %v668, 0.0
    %v734 = vmax.f32 %v671, 0.0
    %v735 = vmax.f32 %v676, 0.0
    %v736 = vmax.f32 %v679, 0.0
    %v737 = vmax.f32 %v684, 0.0
    %v738 = vmax.f32 %v687, 0.0
    %v739 = vmax.f32 %v692, 0.0
    %v740 = vmax.f32 %v695, 0.0
    %v741 = vmax.f32 %v700, 0.0
    %v742 = vmax.f32 %v703, 0.0
    %v743 = vmax.f32 %v708, 0.0
    %v744 = vmax.f32 %v711, 0.0
    %v745 = vmax.f32 %v716, 0.0
    %v746 = vpack.c.bf16 %v722, %v721
    %v747 = vpack.c.bf16 %v724, %v723
    %v748 = vpack.c.bf16 %v726, %v725
    %v749 = vpack.c.bf16 %v728, %v727
    %v750 = vpack.c.bf16 %v730, %v729
    %v751 = vpack.c.bf16 %v732, %v731
    %v752 = vpack.c.bf16 %v734, %v733
    %v753 = vpack.c.bf16 %v736, %v735
    %v754 = vpack.c.bf16 %v738, %v737
    %v755 = vpack.c.bf16 %v740, %v739
    %v756 = vpack.c.bf16 %v742, %v741
    %v757 = vpack.c.bf16 %v744, %v743
    %v758 = vpack.c.bf16 %v745, %v745
    %v760 = vlaneseq
    %v761 = vshrl.u32 %v760, 7
    %v762 = vsub.s32 0, %v761
    %v763 = vrot.slane %v118, %v762
    %v781 = vunpack.c.l.b16 %v100
    %v782 = vunpack.c.h.b16 %v100
    %v783 = vunpack.c.l.b16 %v101
    %v784 = vunpack.c.h.b16 %v101
    %v785 = vunpack.c.l.b16 %v102
    %v786 = vunpack.c.h.b16 %v102
    %v787 = vunpack.c.l.b16 %v103
    %v788 = vunpack.c.h.b16 %v103
    %v789 = vunpack.c.l.b16 %v104
    %v790 = vunpack.c.h.b16 %v104
    %v791 = vunpack.c.l.b16 %v105
    %v792 = vunpack.c.h.b16 %v105
    %v793 = vunpack.c.l.b16 %v106
    %v794 = vunpack.c.h.b16 %v106
    %v795 = vunpack.c.l.b16 %v107
    %v796 = vunpack.c.h.b16 %v107
    %v797 = vunpack.c.l.b16 %v108
    %v798 = vunpack.c.h.b16 %v108
    %v799 = vunpack.c.l.b16 %v109
    %v800 = vunpack.c.h.b16 %v109
    %v801 = vunpack.c.l.b16 %v110
    %v802 = vunpack.c.h.b16 %v110
    %v803 = vunpack.c.l.b16 %v111
    %v804 = vunpack.c.h.b16 %v111
    %v805 = vunpack.c.l.b16 %v112
    %v806 = vunpack.c.h.b16 %v112
    %v807 = vunpack.c.l.b16 %v113
    %v808 = vunpack.c.h.b16 %v113
    %v809 = vunpack.c.l.b16 %v114
    %v810 = vunpack.c.h.b16 %v114
    %v811 = vunpack.c.l.b16 %v115
    %v812 = vunpack.c.h.b16 %v115
    %v813 = vpack.c.b16 %v783, %v781
    %v814 = vpack.c.b16 %v784, %v782
    %v815 = vpack.c.b16 %v787, %v785
    %v816 = vpack.c.b16 %v788, %v786
    %v817 = vpack.c.b16 %v791, %v789
    %v818 = vpack.c.b16 %v792, %v790
    %v819 = vpack.c.b16 %v795, %v793
    %v820 = vpack.c.b16 %v796, %v794
    %v821 = vpack.c.b16 %v799, %v797
    %v822 = vpack.c.b16 %v800, %v798
    %v823 = vpack.c.b16 %v803, %v801
    %v824 = vpack.c.b16 %v804, %v802
    %v825 = vpack.c.b16 %v807, %v805
    %v826 = vpack.c.b16 %v808, %v806
    %v827 = vpack.c.b16 %v811, %v809
    %v828 = vpack.c.b16 %v812, %v810
    %845 = vmatprep.subr.bf16.mxu0 %v814
    %846 = vmatpush1.bf16.msra.mxu0 %v813
    %847 = vmatprep.subr.bf16.mxu0 %v816
    %848 = vmatpush1.bf16.msra.mxu0 %v815
    %849 = vmatprep.subr.bf16.mxu0 %v818
    %850 = vmatpush1.bf16.msra.mxu0 %v817
    %851 = vmatprep.subr.bf16.mxu0 %v820
    %852 = vmatpush1.bf16.msra.mxu0 %v819
    %853 = vmatprep.subr.bf16.mxu0 %v822
    %854 = vmatpush1.bf16.msra.mxu0 %v821
    %855 = vmatprep.subr.bf16.mxu0 %v824
    %856 = vmatpush1.bf16.msra.mxu0 %v823
    %857 = vmatprep.subr.bf16.mxu0 %v826
    %858 = vmatpush1.bf16.msra.mxu0 %v825
    %859 = vmatprep.subr.bf16.mxu0 %v828
    %860 = vmatpush1.bf16.msra.mxu0 %v827
    %861 = vmatprep.subr.bf16.mxu0 0
    %862 = vmatpush1.bf16.msra.mxu0 0
    %863 = vmatprep.subr.bf16.mxu0 0
    %864 = vmatpush1.bf16.msra.mxu0 0
    %865 = vmatprep.subr.bf16.mxu0 0
    %866 = vmatpush1.bf16.msra.mxu0 0
    %867 = vmatprep.subr.bf16.mxu0 0
    %868 = vmatpush1.bf16.msra.mxu0 0
    %869 = vmatprep.subr.bf16.mxu0 0
    %870 = vmatpush1.bf16.msra.mxu0 0
    %871 = vmatprep.subr.bf16.mxu0 0
    %872 = vmatpush1.bf16.msra.mxu0 0
    %873 = vmatprep.subr.bf16.mxu0 0
    %874 = vmatpush1.bf16.msra.mxu0 0
    %875 = vmatprep.subr.bf16.mxu0 0
    %876 = vmatpush1.bf16.msra.mxu0 0
    %877 = vmatprep.mubr.bf16.mxu0 0
    %878 = vmatmul.mubr.bf16.gmra.mrb[0].mxu0 %v746
    %v879 = vpop.f32.mrb[0].mxu0
    %v880 = vadd.f32 %v763, %v879
    %v881 = vpop.f32.mrb[0].mxu0
    %v882 = vpop.f32.mrb[0].mxu0
    %v883 = vadd.f32 %v763, %v882
    %v884 = vpop.f32.mrb[0].mxu0
    %885 = vmatprep.mubr.bf16.mxu0 0
    %886 = vmatmul.mubr.bf16.gmra.mrb[0].mxu0 %v747
    %v887 = vpop.f32.mrb[0].mxu0
    %v888 = vadd.f32 %v763, %v887
    %v889 = vpop.f32.mrb[0].mxu0
    %v890 = vpop.f32.mrb[0].mxu0
    %v891 = vadd.f32 %v763, %v890
    %v892 = vpop.f32.mrb[0].mxu0
    %893 = vmatprep.mubr.bf16.mxu0 0
    %894 = vmatmul.mubr.bf16.gmra.mrb[0].mxu0 %v748
    %v895 = vpop.f32.mrb[0].mxu0
    %v896 = vadd.f32 %v763, %v895
    %v897 = vpop.f32.mrb[0].mxu0
    %v898 = vpop.f32.mrb[0].mxu0
    %v899 = vadd.f32 %v763, %v898
    %v900 = vpop.f32.mrb[0].mxu0
    %901 = vmatprep.mubr.bf16.mxu0 0
    %902 = vmatmul.mubr.bf16.gmra.mrb[0].mxu0 %v749
    %v903 = vpop.f32.mrb[0].mxu0
    %v904 = vadd.f32 %v763, %v903
    %v905 = vpop.f32.mrb[0].mxu0
    %v906 = vpop.f32.mrb[0].mxu0
    %v907 = vadd.f32 %v763, %v906
    %v908 = vpop.f32.mrb[0].mxu0
    %909 = vmatprep.mubr.bf16.mxu0 0
    %910 = vmatmul.mubr.bf16.gmra.mrb[0].mxu0 %v750
    %v911 = vpop.f32.mrb[0].mxu0
    %v912 = vadd.f32 %v763, %v911
    %v913 = vpop.f32.mrb[0].mxu0
    %v914 = vpop.f32.mrb[0].mxu0
    %v915 = vadd.f32 %v763, %v914
    %v916 = vpop.f32.mrb[0].mxu0
    %917 = vmatprep.mubr.bf16.mxu0 0
    %918 = vmatmul.mubr.bf16.gmra.mrb[0].mxu0 %v751
    %v919 = vpop.f32.mrb[0].mxu0
    %v920 = vadd.f32 %v763, %v919
    %v921 = vpop.f32.mrb[0].mxu0
    %v922 = vpop.f32.mrb[0].mxu0
    %v923 = vadd.f32 %v763, %v922
    %v924 = vpop.f32.mrb[0].mxu0
    %925 = vmatprep.mubr.bf16.mxu0 0
    %926 = vmatmul.mubr.bf16.gmra.mrb[0].mxu0 %v752
    %v927 = vpop.f32.mrb[0].mxu0
    %v928 = vadd.f32 %v763, %v927
    %v929 = vpop.f32.mrb[0].mxu0
    %v930 = vpop.f32.mrb[0].mxu0
    %v931 = vadd.f32 %v763, %v930
    %v932 = vpop.f32.mrb[0].mxu0
    %933 = vmatprep.mubr.bf16.mxu0 0
    %934 = vmatmul.mubr.bf16.gmra.mrb[0].mxu0 %v753
    %v935 = vpop.f32.mrb[0].mxu0
    %v936 = vadd.f32 %v763, %v935
    %v937 = vpop.f32.mrb[0].mxu0
    %v938 = vpop.f32.mrb[0].mxu0
    %v939 = vadd.f32 %v763, %v938
    %v940 = vpop.f32.mrb[0].mxu0
    %941 = vmatprep.mubr.bf16.mxu0 0
    %942 = vmatmul.mubr.bf16.gmra.mrb[0].mxu0 %v754
    %v943 = vpop.f32.mrb[0].mxu0
    %v944 = vadd.f32 %v763, %v943
    %v945 = vpop.f32.mrb[0].mxu0
    %v946 = vpop.f32.mrb[0].mxu0
    %v947 = vadd.f32 %v763, %v946
    %v948 = vpop.f32.mrb[0].mxu0
    %949 = vmatprep.mubr.bf16.mxu0 0
    %950 = vmatmul.mubr.bf16.gmra.mrb[0].mxu0 %v755
    %v951 = vpop.f32.mrb[0].mxu0
    %v952 = vadd.f32 %v763, %v951
    %v953 = vpop.f32.mrb[0].mxu0
    %v954 = vpop.f32.mrb[0].mxu0
    %v955 = vadd.f32 %v763, %v954
    %v956 = vpop.f32.mrb[0].mxu0
    %957 = vmatprep.mubr.bf16.mxu0 0
    %958 = vmatmul.mubr.bf16.gmra.mrb[0].mxu0 %v756
    %v959 = vpop.f32.mrb[0].mxu0
    %v960 = vadd.f32 %v763, %v959
    %v961 = vpop.f32.mrb[0].mxu0
    %v962 = vpop.f32.mrb[0].mxu0
    %v963 = vadd.f32 %v763, %v962
    %v964 = vpop.f32.mrb[0].mxu0
    %965 = vmatprep.mubr.bf16.mxu0 0
    %966 = vmatmul.mubr.bf16.gmra.mrb[0].mxu0 %v757
    %v967 = vpop.f32.mrb[0].mxu0
    %v968 = vadd.f32 %v763, %v967
    %v969 = vpop.f32.mrb[0].mxu0
    %v970 = vpop.f32.mrb[0].mxu0
    %v971 = vadd.f32 %v763, %v970
    %v972 = vpop.f32.mrb[0].mxu0
    %973 = vmatprep.mubr.bf16.mxu0 0
    %974 = vmatmul.mubr.bf16.gmra.mrb[0].mxu0 %v758
    %v975 = vpop.f32.mrb[0].mxu0
    %v976 = vadd.f32 %v763, %v975
    %v977 = vpop.f32.mrb[0].mxu0
    %v978 = vpop.f32.mrb[0].mxu0
    %v979 = vpop.f32.mrb[0].mxu0
    %980 = vdwg.mxu0
    %v981 = vtanh.pop %v880
    %v982 = vtanh.pop %v883
    %v983 = vtanh.pop %v888
    %v984 = vtanh.pop %v891
    %v985 = vtanh.pop %v896
    %v986 = vtanh.pop %v899
    %v987 = vtanh.pop %v904
    %v988 = vtanh.pop %v907
    %v989 = vtanh.pop %v912
    %v990 = vtanh.pop %v915
    %v991 = vtanh.pop %v920
    %v992 = vtanh.pop %v923
    %v993 = vtanh.pop %v928
    %v994 = vtanh.pop %v931
    %v995 = vtanh.pop %v936
    %v996 = vtanh.pop %v939
    %v997 = vtanh.pop %v944
    %v998 = vtanh.pop %v947
    %v999 = vtanh.pop %v952
    %v1000 = vtanh.pop %v955
    %v1001 = vtanh.pop %v960
    %v1002 = vtanh.pop %v963
    %v1003 = vtanh.pop %v968
    %v1004 = vtanh.pop %v971
    %v1005 = vtanh.pop %v976
    %1006 = vst [vmem:[%s3] sm:$0xff] %v981
    %1007 = vst [vmem:[%s3 + $0x8] sm:$0xff] %v982
    %1008 = vst [vmem:[%s3 + $0x10] sm:$0xff] %v983
    %1009 = vst [vmem:[%s3 + $0x18] sm:$0xff] %v984
    %1010 = vst [vmem:[%s3 + $0x20] sm:$0xff] %v985
    %1011 = vst [vmem:[%s3 + $0x28] sm:$0xff] %v986
    %1012 = vst [vmem:[%s3 + $0x30] sm:$0xff] %v987
    %1013 = vst [vmem:[%s3 + $0x38] sm:$0xff] %v988
    %1014 = vst [vmem:[%s3 + $0x40] sm:$0xff] %v989
    %1015 = vst [vmem:[%s3 + $0x48] sm:$0xff] %v990
    %1016 = vst [vmem:[%s3 + $0x50] sm:$0xff] %v991
    %1017 = vst [vmem:[%s3 + $0x58] sm:$0xff] %v992
    %1018 = vst [vmem:[%s3 + $0x60] sm:$0xff] %v993
    %1019 = vst [vmem:[%s3 + $0x68] sm:$0xff] %v994
    %1020 = vst [vmem:[%s3 + $0x70] sm:$0xff] %v995
    %1021 = vst [vmem:[%s3 + $0x78] sm:$0xff] %v996
    %1022 = vst [vmem:[%s3 + $0x80] sm:$0xff] %v997
    %1023 = vst [vmem:[%s3 + $0x88] sm:$0xff] %v998
    %1024 = vst [vmem:[%s3 + $0x90] sm:$0xff] %v999
    %1025 = vst [vmem:[%s3 + $0x98] sm:$0xff] %v1000
    %1026 = vst [vmem:[%s3 + $0xa0] sm:$0xff] %v1001
    %1027 = vst [vmem:[%s3 + $0xa8] sm:$0xff] %v1002
    %1028 = vst [vmem:[%s3 + $0xb0] sm:$0xff] %v1003
    %1029 = vst [vmem:[%s3 + $0xb8] sm:$0xff] %v1004
    %1030 = vst [vmem:[%s3 + $0xc0] sm:$0xff] %v1005
    // Predicated region
    $region18: #{actor_forward.1} parent=1 // pred_check
      _
    $region19: #{actor_forward.1} parent=1 // pred_check_branch
      %1032 = sbr.rel (0) target = $region21
    $region20: #{actor_forward.1} parent=1 // pred_region
      _
    $region21: #{actor_forward.1} parent=1 // pred_fallthru
      _
    // Predicated region
    $region22: #{actor_forward.1} parent=1 // pred_check
      _
    $region23: #{actor_forward.1} parent=1 // pred_check_branch
      %1034 = sbr.rel (0) target = $region25
    $region24: #{actor_forward.1} parent=1 // pred_region
      _
    $region25: #{actor_forward.1} parent=1 // pred_fallthru
      _
    %1035 = vsyncpa [#allocation3], 1

</llo_original>
